<compile_context>
chip_gen: v7x
topology: tpu7x:2x2x1
jax: 0.10.0
libtpu: 0.0.40
codegen_flags: <defaults>
</compile_context>

<pallas_src>
import functools

import jax
import jax.numpy as jnp
from jax.experimental import pallas as pl
from jax.experimental.pallas import tpu as pltpu

_LANE = 128
_SUBLANE = 8
_VMEM_BUDGET_BYTES = 12 * 1024 * 1024  # stays under v5e's 16 MiB scoped default


def _round_up(n, m):
    return (n + m - 1) // m * m


def _output_kernel(x_ref, u_ref, wx_ref, wu_ref, y_ref):
    # Two tiny MXU passes (MXU is essentially idle for K<=128, ny<=128);
    # accumulate in f32, cast once on store.
    acc = jnp.dot(x_ref[...], wx_ref[...], preferred_element_type=jnp.float32)
    acc = acc + jnp.dot(u_ref[...], wu_ref[...], preferred_element_type=jnp.float32)
    y_ref[...] = acc.astype(y_ref.dtype)


def _tile_rows(B, nx, nu, ny, in_itemsize, out_itemsize, block_b):
    """Pick the batch-tile row count: big, VMEM-safe, sublane-aligned."""
    # Inside VMEM every block is lane-padded to 128 and double-buffered by the
    # BlockSpec pipeline -> per-row VMEM cost:
    per_row = (2 * (_round_up(nx, _LANE) + _round_up(nu, _LANE)) * in_itemsize
               + 2 * _round_up(ny, _LANE) * out_itemsize)
    cap = max(_SUBLANE, (_VMEM_BUDGET_BYTES // per_row) // _SUBLANE * _SUBLANE)
    block_b = max(_SUBLANE, (block_b // _SUBLANE) * _SUBLANE)
    tb = min(block_b, cap)
    if B <= tb:
        return B  # single full block (block dim == array dim is always legal)
    return tb     # multiple of 8; ragged last block handled by Pallas boundaries


@functools.partial(jax.jit, static_argnames=("block_b",))
def output_net_apply(x, u, Wx, Wu, *, block_b=4096):
    """y[b] = x[b] @ Wx + u[b] @ Wu  with Wx = C^T (nx,ny), Wu = D^T (nu,ny)."""
    B, nx = x.shape
    Bu, nu = u.shape
    assert Bu == B, "x and u must share the batch dimension"
    nx_w, ny = Wx.shape
    nu_w, ny_u = Wu.shape
    assert nx_w == nx and nu_w == nu and ny_u == ny, "weight shapes mismatch"

    out_dtype = x.dtype
    in_itemsize = jnp.dtype(x.dtype).itemsize
    out_itemsize = jnp.dtype(out_dtype).itemsize
    w_itemsize = jnp.dtype(Wx.dtype).itemsize

    TB = _tile_rows(B, nx, nu, ny, in_itemsize, out_itemsize, block_b)
    grid = (pl.cdiv(B, TB),)

    cost = pl.CostEstimate(
        flops=2 * B * (nx + nu) * ny,
        transcendentals=0,
        bytes_accessed=(B * (nx + nu) * in_itemsize
                        + (nx + nu) * ny * w_itemsize
                        + B * ny * out_itemsize),
    )

    return pl.pallas_call(
        _output_kernel,
        out_shape=jax.ShapeDtypeStruct((B, ny), out_dtype),
        grid_spec=pltpu.PrefetchScalarGridSpec(
            num_scalar_prefetch=0,
            grid=grid,
            in_specs=[
                # Batch-tiled activations, double-buffered by the pipeline.
                pl.BlockSpec((TB, nx), lambda i: (i, 0)),
                pl.BlockSpec((TB, nu), lambda i: (i, 0)),
                # Tiny weights; constant index_map -> fetched once, stay resident.
                pl.BlockSpec((nx, ny), lambda i: (0, 0)),
                pl.BlockSpec((nu, ny), lambda i: (0, 0)),
            ],
            out_specs=pl.BlockSpec((TB, ny), lambda i: (i, 0)),
        ),
        compiler_params=pltpu.CompilerParams(
            dimension_semantics=("parallel",),
        ),
        cost_estimate=cost,
    )(x, u, Wx, Wu)


def default_output_net_forward(x, u, C, D, *, block_b=4096, min_pallas_rows=2048,
                               force_pallas=False):
    """Matches default_output_net.forward(x, u) for an LTI MApar: y = C x + D u."""
    # TODO(synk): only the LTI f_h (y = C x + D u) of the augmentation params is
    # implemented; a user-supplied nonlinear MApar.f_h has no generic Pallas form.
    if (not force_pallas) and x.shape[0] < min_pallas_rows:
        # Tiny batches: plain XLA fusion beats the pallas_call fixed cost.
        return (x @ C.T.astype(x.dtype) + u @ D.T.astype(u.dtype)).astype(x.dtype)
    Wx = C.T.astype(x.dtype)  # (nx, ny)
    Wu = D.T.astype(x.dtype)  # (nu, ny)
    return output_net_apply(x, u, Wx, Wu, block_b=block_b)


if __name__ == "__main__":
    key = jax.random.PRNGKey(0)
    kx, ku, kC, kD = jax.random.split(key, 4)

    # Shapes consistent with the module's LTI output map.
    nx, nu, ny = 32, 8, 4
    C = jax.random.normal(kC, (ny, nx), dtype=jnp.float32) * 0.1
    D = jax.random.normal(kD, (ny, nu), dtype=jnp.float32) * 0.1

    # --- Small batch: force the Pallas path (single full block) ---------------
    B = 8
    x = jax.random.normal(kx, (B, nx), dtype=jnp.float32)
    u = jax.random.normal(ku, (B, nu), dtype=jnp.float32)
    y = default_output_net_forward(x, u, C, D, force_pallas=True)
    jax.block_until_ready(y)
    y_ref = x @ C.T + u @ D.T
    assert y.shape == (B, ny)
    assert jnp.allclose(y, y_ref, atol=1e-5, rtol=1e-5)

    # --- Larger batch: exercises tiling + ragged last block (no wrapper pad) --
    B2 = 2500  # > min_pallas_rows, not a multiple of the 512-row tile
    x2 = jax.random.normal(kx, (B2, nx), dtype=jnp.float32)
    u2 = jax.random.normal(ku, (B2, nu), dtype=jnp.float32)
    y2 = default_output_net_forward(x2, u2, C, D, block_b=512)
    jax.block_until_ready(y2)
    y2_ref = x2 @ C.T + u2 @ D.T
    assert y2.shape == (B2, ny)
    assert jnp.allclose(y2, y2_ref, atol=1e-5, rtol=1e-5)

    # --- Small batch via the default dispatch (plain XLA path) ----------------
    B3 = 100
    x3 = jax.random.normal(kx, (B3, nx), dtype=jnp.float32)
    u3 = jax.random.normal(ku, (B3, nu), dtype=jnp.float32)
    y3 = default_output_net_forward(x3, u3, C, D)
    jax.block_until_ready(y3)
    assert jnp.allclose(y3, x3 @ C.T + u3 @ D.T, atol=1e-5, rtol=1e-5)

    print("KERNEL_OK")
</pallas_src>

<mosaic_0001>
module attributes {stable_mosaic.version = 11 : i64} {
  func.func @_output_kernel(%arg0: i32, %arg1: memref<8x32xf32, #tpu.memory_space<vmem>>, %arg2: memref<8x8xf32, #tpu.memory_space<vmem>>, %arg3: memref<32x4xf32, #tpu.memory_space<vmem>>, %arg4: memref<8x4xf32, #tpu.memory_space<vmem>>, %arg5: memref<8x4xf32, #tpu.memory_space<vmem>>) attributes {dimension_semantics = [#tpu.dimension_semantics<parallel>], iteration_bounds = array<i64: 1>, scalar_prefetch = 0 : i64, scratch_operands = 0 : i64, tpu.core_type = #tpu.core_type<tc>, window_params = [{transform_indices = @transform_0, window_bounds = array<i64: 8, 32>}, {transform_indices = @transform_1, window_bounds = array<i64: 8, 8>}, {pipeline_mode = #tpu.pipeline_mode<synchronous>, transform_indices = @transform_2, window_bounds = array<i64: 32, 4>}, {pipeline_mode = #tpu.pipeline_mode<synchronous>, transform_indices = @transform_3, window_bounds = array<i64: 8, 4>}, {transform_indices = @transform_4, window_bounds = array<i64: 8, 4>}]} {
    %c0 = arith.constant 0 : index
    %c0_0 = arith.constant 0 : index
    %0 = vector.load %arg1[%c0, %c0_0] : memref<8x32xf32, #tpu.memory_space<vmem>>, vector<8x32xf32>
    %c0_1 = arith.constant 0 : index
    %c0_2 = arith.constant 0 : index
    %1 = vector.load %arg3[%c0_1, %c0_2] : memref<32x4xf32, #tpu.memory_space<vmem>>, vector<32x4xf32>
    %cst = arith.constant dense<0.000000e+00> : vector<8x4xf32>
    %2 = tpu.matmul %0, %1, %cst {dimension_numbers = #tpu.dot_dimension_numbers<[1], [0], [0], [1], [0, 0, 1, 1], [], []>} : vector<8x32xf32>, vector<32x4xf32>, vector<8x4xf32> -> vector<8x4xf32>
    %c0_3 = arith.constant 0 : index
    %c0_4 = arith.constant 0 : index
    %3 = vector.load %arg2[%c0_3, %c0_4] : memref<8x8xf32, #tpu.memory_space<vmem>>, vector<8x8xf32>
    %c0_5 = arith.constant 0 : index
    %c0_6 = arith.constant 0 : index
    %4 = vector.load %arg4[%c0_5, %c0_6] : memref<8x4xf32, #tpu.memory_space<vmem>>, vector<8x4xf32>
    %cst_7 = arith.constant dense<0.000000e+00> : vector<8x4xf32>
    %5 = tpu.matmul %3, %4, %cst_7 {dimension_numbers = #tpu.dot_dimension_numbers<[1], [0], [0], [1], [0, 0, 1, 1], [], []>} : vector<8x8xf32>, vector<8x4xf32>, vector<8x4xf32> -> vector<8x4xf32>
    %6 = arith.addf %2, %5 : vector<8x4xf32>
    %c0_8 = arith.constant 0 : index
    %c0_9 = arith.constant 0 : index
    %7 = vector.load %arg5[%c0_8, %c0_9] : memref<8x4xf32, #tpu.memory_space<vmem>>, vector<8x4xf32>
    tpu.vector_store %arg5[%c0_8, %c0_9], %6 {strides = array<i32>} : memref<8x4xf32, #tpu.memory_space<vmem>>, vector<8x4xf32>,
    return
  }
  func.func @transform_0(%arg0: i32) -> (i32, i32) {
    %c0_i32 = arith.constant 0 : i32
    %c0_i32_0 = arith.constant 0 : i32
    return %arg0, %c0_i32 : i32, i32
  }
  func.func @transform_1(%arg0: i32) -> (i32, i32) {
    %c0_i32 = arith.constant 0 : i32
    %c0_i32_0 = arith.constant 0 : i32
    return %arg0, %c0_i32 : i32, i32
  }
  func.func @transform_2(%arg0: i32) -> (i32, i32) {
    %c0_i32 = arith.constant 0 : i32
    %c0_i32_0 = arith.constant 0 : i32
    %c0_i32_1 = arith.constant 0 : i32
    return %c0_i32, %c0_i32_0 : i32, i32
  }
  func.func @transform_3(%arg0: i32) -> (i32, i32) {
    %c0_i32 = arith.constant 0 : i32
    %c0_i32_0 = arith.constant 0 : i32
    %c0_i32_1 = arith.constant 0 : i32
    return %c0_i32, %c0_i32_0 : i32, i32
  }
  func.func @transform_4(%arg0: i32) -> (i32, i32) {
    %c0_i32 = arith.constant 0 : i32
    %c0_i32_0 = arith.constant 0 : i32
    return %arg0, %c0_i32 : i32, i32
  }
}

</mosaic_0001>

<llo_original>
// kernel: output_net_apply.1
$region0: #{output_net_apply.1}
  #allocation0 [shape = 'u32[]', space=smem, size = 0x4, offset = 0x4, fixed_abs, tag = 'smem constant byte address 0x4 - core index']
  #allocation1 [shape = 'u32[144,128]{1,0:T(1,128)}', space=vmem, size = 0x12000, scoped, tag = 'internal scratch']
  %s0 = inlined_call_operand.vmem [shape: f32[8,32], index: 0, kind: input, shape index: {}]
  %s1 = inlined_call_operand.vmem [shape: f32[8,8], index: 1, kind: input, shape index: {}]
  %s2 = inlined_call_operand.vmem [shape: f32[32,4], index: 2, kind: input, shape index: {}]
  %s3 = inlined_call_operand.vmem [shape: f32[8,4], index: 3, kind: input, shape index: {}]
  %s4 = inlined_call_operand.vmem [shape: f32[8,4], index: 4, kind: output, shape index: {}]
  %s5 = sld [smem:[#allocation0]]
  $region26: #{output_net_apply.1} parent=0
    _
  %s7 = ssub.s32 1, %s5
  %s8 = scalar_select 0, %s7, %s5
  // Predicated region
  $region2: #{output_net_apply.1} parent=0 // pred_check
    _
  $region3: #{output_net_apply.1} parent=0 // pred_check_branch
    %10 = sbr.rel (0) target = $region5
  $region4: #{output_net_apply.1} parent=0 // pred_region
    _
  $region5: #{output_net_apply.1} parent=0 // pred_fallthru
    _
  // Predicated region
  $region6: #{output_net_apply.1} parent=0 // pred_check
    _
  $region7: #{output_net_apply.1} parent=0 // pred_check_branch
    %12 = sbr.rel (0) target = $region9
  $region8: #{output_net_apply.1} parent=0 // pred_region
    _
  $region9: #{output_net_apply.1} parent=0 // pred_fallthru
    _
  // Predicated region
  $region10: #{output_net_apply.1} parent=0 // pred_check
    _
  $region11: #{output_net_apply.1} parent=0 // pred_check_branch
    %14 = sbr.rel (0) target = $region13
  $region12: #{output_net_apply.1} parent=0 // pred_region
    _
  $region13: #{output_net_apply.1} parent=0 // pred_fallthru
    _
  // Predicated region
  $region14: #{output_net_apply.1} parent=0 // pred_check
    _
  $region15: #{output_net_apply.1} parent=0 // pred_check_branch
    %16 = sbr.rel (0) target = $region17
  $region16: #{output_net_apply.1} parent=0 // pred_region
    _
  $region17: #{output_net_apply.1} parent=0 // pred_fallthru
    _
  %v17 = vld [vmem:[%s0] sm:$0xff]
  %v18 = vld [vmem:[%s2] sm:$0xff]
  %v19 = vld [vmem:[%s2 + $0x8] sm:$0xff]
  %v20 = vld [vmem:[%s2 + $0x10] sm:$0xff]
  %v21 = vld [vmem:[%s2 + $0x18] sm:$0xff]
  %v22 = vld [vmem:[%s1] sm:$0xff]
  %v23 = vld [vmem:[%s3] sm:$0xff]
  %vm24 = vcmask 64512
  %v26 = vsel %vm24, %v22, 0
  %28 = vmatprep.subr.mxu0 0.0
  %29 = vmatpush1.msra.mxu0 %v23
  %30 = vmatprep.subr.mxu0 0.0
  %31 = vmatpush1.msra.mxu0 0.0
  %32 = vmatprep.subr.mxu0 0.0
  %33 = vmatpush1.msra.mxu0 0.0
  %34 = vmatprep.subr.mxu0 0.0
  %35 = vmatpush1.msra.mxu0 0.0
  %36 = vmatprep.subr.mxu0 0.0
  %37 = vmatpush1.msra.mxu0 0.0
  %38 = vmatprep.subr.mxu0 0.0
  %39 = vmatpush1.msra.mxu0 0.0
  %40 = vmatprep.subr.mxu0 0.0
  %41 = vmatpush1.msra.mxu0 0.0
  %42 = vmatprep.subr.mxu0 0.0
  %43 = vmatpush1.msra.mxu0 0.0
  %44 = vmatprep.subr.mxu0 0.0
  %45 = vmatpush1.msra.mxu0 0.0
  %46 = vmatprep.subr.mxu0 0.0
  %47 = vmatpush1.msra.mxu0 0.0
  %48 = vmatprep.subr.mxu0 0.0
  %49 = vmatpush1.msra.mxu0 0.0
  %50 = vmatprep.subr.mxu0 0.0
  %51 = vmatpush1.msra.mxu0 0.0
  %52 = vmatprep.subr.mxu0 0.0
  %53 = vmatpush1.msra.mxu0 0.0
  %54 = vmatprep.subr.mxu0 0.0
  %55 = vmatpush1.msra.mxu0 0.0
  %56 = vmatprep.subr.mxu0 0.0
  %57 = vmatpush1.msra.mxu0 0.0
  %58 = vmatprep.subr.mxu0 0.0
  %59 = vmatpush1.msra.mxu0 0.0
  %60 = vmatprep.subr.mxu0 0.0
  %61 = vmatpush1.msra.mxu0 0.0
  %62 = vmatprep.subr.mxu0 0.0
  %63 = vmatpush1.msra.mxu0 0.0
  %64 = vmatprep.subr.mxu0 0.0
  %65 = vmatpush1.msra.mxu0 0.0
  %66 = vmatprep.subr.mxu0 0.0
  %67 = vmatpush1.msra.mxu0 0.0
  %68 = vmatprep.subr.mxu0 0.0
  %69 = vmatpush1.msra.mxu0 0.0
  %70 = vmatprep.subr.mxu0 0.0
  %71 = vmatpush1.msra.mxu0 0.0
  %72 = vmatprep.subr.mxu0 0.0
  %73 = vmatpush1.msra.mxu0 0.0
  %74 = vmatprep.subr.mxu0 0.0
  %75 = vmatpush1.msra.mxu0 0.0
  %76 = vmatprep.subr.mxu0 0.0
  %77 = vmatpush1.msra.mxu0 0.0
  %78 = vmatprep.subr.mxu0 0.0
  %79 = vmatpush1.msra.mxu0 0.0
  %80 = vmatprep.subr.mxu0 0.0
  %81 = vmatpush1.msra.mxu0 0.0
  %82 = vmatprep.subr.mxu0 0.0
  %83 = vmatpush1.msra.mxu0 0.0
  %84 = vmatprep.subr.mxu0 0.0
  %85 = vmatpush1.msra.mxu0 0.0
  %86 = vmatprep.subr.mxu0 0.0
  %87 = vmatpush1.msra.mxu0 0.0
  %88 = vmatprep.subr.mxu0 0.0
  %89 = vmatpush1.msra.mxu0 0.0
  %90 = vmatprep.subr.mxu0 0.0
  %91 = vmatpush1.msra.mxu0 0.0
  %92 = vmatprep.mubr.f32.mxu0 0.0
  %93 = vmatmul.mubr.f32.gmra.mrb[0].mxu0 %v26
  %v94 = vpop.f32.mrb[0].mxu0
  %v95 = vadd.f32 0.0, %v94
  %v96 = vpop.f32.mrb[0].mxu0
  %97 = vdwg.mxu0
  %vm98 = vcmask 261120
  %v100 = vsel %vm98, %v17, 0
  %102 = vmatprep.subr.mxu0 0.0
  %103 = vmatpush1.msra.mxu0 %v18
  %104 = vmatprep.subr.mxu0 0.0
  %105 = vmatpush1.msra.mxu0 %v19
  %106 = vmatprep.subr.mxu0 0.0
  %107 = vmatpush1.msra.mxu0 %v20
  %108 = vmatprep.subr.mxu0 0.0
  %109 = vmatpush1.msra.mxu0 %v21
  %110 = vmatprep.subr.mxu0 0.0
  %111 = vmatpush1.msra.mxu0 0.0
  %112 = vmatprep.subr.mxu0 0.0
  %113 = vmatpush1.msra.mxu0 0.0
  %114 = vmatprep.subr.mxu0 0.0
  %115 = vmatpush1.msra.mxu0 0.0
  %116 = vmatprep.subr.mxu0 0.0
  %117 = vmatpush1.msra.mxu0 0.0
  %118 = vmatprep.subr.mxu0 0.0
  %119 = vmatpush1.msra.mxu0 0.0
  %120 = vmatprep.subr.mxu0 0.0
  %121 = vmatpush1.msra.mxu0 0.0
  %122 = vmatprep.subr.mxu0 0.0
  %123 = vmatpush1.msra.mxu0 0.0
  %124 = vmatprep.subr.mxu0 0.0
  %125 = vmatpush1.msra.mxu0 0.0
  %126 = vmatprep.subr.mxu0 0.0
  %127 = vmatpush1.msra.mxu0 0.0
  %128 = vmatprep.subr.mxu0 0.0
  %129 = vmatpush1.msra.mxu0 0.0
  %130 = vmatprep.subr.mxu0 0.0
  %131 = vmatpush1.msra.mxu0 0.0
  %132 = vmatprep.subr.mxu0 0.0
  %133 = vmatpush1.msra.mxu0 0.0
  %134 = vmatprep.subr.mxu0 0.0
  %135 = vmatpush1.msra.mxu0 0.0
  %136 = vmatprep.subr.mxu0 0.0
  %137 = vmatpush1.msra.mxu0 0.0
  %138 = vmatprep.subr.mxu0 0.0
  %139 = vmatpush1.msra.mxu0 0.0
  %140 = vmatprep.subr.mxu0 0.0
  %141 = vmatpush1.msra.mxu0 0.0
  %142 = vmatprep.subr.mxu0 0.0
  %143 = vmatpush1.msra.mxu0 0.0
  %144 = vmatprep.subr.mxu0 0.0
  %145 = vmatpush1.msra.mxu0 0.0
  %146 = vmatprep.subr.mxu0 0.0
  %147 = vmatpush1.msra.mxu0 0.0
  %148 = vmatprep.subr.mxu0 0.0
  %149 = vmatpush1.msra.mxu0 0.0
  %150 = vmatprep.subr.mxu0 0.0
  %151 = vmatpush1.msra.mxu0 0.0
  %152 = vmatprep.subr.mxu0 0.0
  %153 = vmatpush1.msra.mxu0 0.0
  %154 = vmatprep.subr.mxu0 0.0
  %155 = vmatpush1.msra.mxu0 0.0
  %156 = vmatprep.subr.mxu0 0.0
  %157 = vmatpush1.msra.mxu0 0.0
  %158 = vmatprep.subr.mxu0 0.0
  %159 = vmatpush1.msra.mxu0 0.0
  %160 = vmatprep.subr.mxu0 0.0
  %161 = vmatpush1.msra.mxu0 0.0
  %162 = vmatprep.subr.mxu0 0.0
  %163 = vmatpush1.msra.mxu0 0.0
  %164 = vmatprep.subr.mxu0 0.0
  %165 = vmatpush1.msra.mxu0 0.0
  %166 = vmatprep.mubr.f32.mxu0 0.0
  %167 = vmatmul.mubr.f32.gmra.mrb[0].mxu0 %v100
  %v168 = vpop.f32.mrb[0].mxu0
  %v169 = vadd.f32 %v95, %v168
  %v170 = vpop.f32.mrb[0].mxu0
  %171 = vdwg.mxu0
  %vm172 = vcmask 31744
  %173 = vst.msk [vmem:[%s4] sm:$0xff] %vm172, %v169
  // Predicated region
  $region18: #{output_net_apply.1} parent=0 // pred_check
    _
  $region19: #{output_net_apply.1} parent=0 // pred_check_branch
    %175 = sbr.rel (0) target = $region21
  $region20: #{output_net_apply.1} parent=0 // pred_region
    _
  $region21: #{output_net_apply.1} parent=0 // pred_fallthru
    _
  // Predicated region
  $region22: #{output_net_apply.1} parent=0 // pred_check
    _
  $region23: #{output_net_apply.1} parent=0 // pred_check_branch
    %177 = sbr.rel (0) target = $region25
  $region24: #{output_net_apply.1} parent=0 // pred_region
    _
  $region25: #{output_net_apply.1} parent=0 // pred_fallthru
    _

</llo_original>
